<compile_context>
chip_gen: v5e
topology: v5e:2x2
jax: 0.10.0
libtpu: 0.0.40
codegen_flags: <defaults>
</compile_context>

<pallas_src>
import jax
import jax.numpy as jnp
from jax.experimental import pallas as pl
from jax.experimental.pallas import tpu as pltpu


def _round_up(n, m):
    return ((n + m - 1) // m) * m


def _vmem_capacity_bytes():
    """Physical VMEM per TensorCore (64 MiB on v7x, 128 MiB on v5e/v6e)."""
    try:
        return int(pltpu.get_tpu_info().vmem_capacity_bytes)
    except Exception:
        return 64 * 1024 * 1024  # conservative (v7x-sized) fallback


def _pick_tiles(B, R, itemsize, vmem_cap):
    """Byte-sized tiles: the double-buffered x block targets ~3/8 of VMEM."""
    budget = (vmem_cap * 3) // 8
    if B <= 128:
        TB = B                                   # single small full-dim block
    else:
        rows = budget // (2 * R * itemsize)      # rows whose 2x block fits budget
        TB = max(128, (rows // 128) * 128)       # lane-dense output => mult of 128
        if B * R * itemsize > (4 << 20):         # megacore (v7x): keep >= ~4 steps
            TB = min(TB, max(128, _round_up(pl.cdiv(B, 4), 128)))
        if TB >= B:
            TB = B                               # one full block covers the batch
    if 2 * TB * R * itemsize > budget:
        # Very large rep_size: tile R too (keeps depth-2 pipelining + VMEM fit).
        TR = max(128, ((budget // (2 * TB * itemsize)) // 128) * 128)
        TR = min(TR, R)
    else:
        TR = R
    return TB, TR


def _make_kernel(R, TR, nr):
    """Kernel body specialized on static shapes (R, TR) and #R-blocks nr."""
    CH = 128 if TR >= 128 else TR
    nfull = TR // CH
    rem = TR - nfull * CH
    use_acc = nr > 1
    ragged_r = use_acc and (R % TR != 0)
    assert not (use_acc and rem), "R-tiled blocks must be a multiple of 128"

    def kernel(x_ref, w_ref, b_ref, o_ref, *scratch):
        tb = x_ref.shape[0]
        k = pl.program_id(1)

        def chunk(off, width):
            xc = jnp.maximum(x_ref[:, off:off + width], 0.0).astype(jnp.float32)
            wc = w_ref[:, off:off + width].astype(jnp.float32)
            prod = xc * wc                                    # VPU, f32 accumulate
            if ragged_r:                                      # mask cols >= R in the
                col = jax.lax.broadcasted_iota(jnp.int32, (1, width), 1)
                prod = jnp.where(k * TR + off + col < R, prod, 0.0)
            return prod

        part = chunk(0, CH)
        for c in range(1, nfull):                             # static unroll over R
            part = part + chunk(c * CH, CH)

        if use_acc:
            acc_ref = scratch[0]

            @pl.when(k == 0)
            def _():
                acc_ref[...] = part

            @pl.when(k > 0)
            def _():
                acc_ref[...] += part

            @pl.when(k == pl.num_programs(1) - 1)
            def _():
                row = jnp.sum(acc_ref[...], axis=-1) + b_ref[0]
                o_ref[...] = jnp.reshape(row, (1, tb)).astype(o_ref.dtype)
        else:
            row = jnp.sum(part, axis=-1)                      # single lane reduce
            if rem:
                row = row + jnp.sum(chunk(nfull * CH, rem), axis=-1)
            row = row + b_ref[0]
            o_ref[...] = jnp.reshape(row, (1, tb)).astype(o_ref.dtype)

    return kernel


def predictor_forward(x, weight, bias, *, tile_vmem_budget=None):
    """x: (B, R); weight: (1, R) (PyTorch nn.Linear layout); bias: (1,) -> (B, 1)."""
    B, R = x.shape
    assert weight.shape == (1, R), weight.shape
    bias = jnp.reshape(bias, (1,)).astype(jnp.float32)        # f32 bias in SMEM

    itemsize = jnp.dtype(x.dtype).itemsize
    device_cap = _vmem_capacity_bytes()
    pick_cap = device_cap if tile_vmem_budget is None else tile_vmem_budget
    TB, TR = _pick_tiles(B, R, itemsize, pick_cap)
    nb = pl.cdiv(B, TB)
    nr = pl.cdiv(R, TR)

    scratch = [pltpu.VMEM((TB, 128), jnp.float32)] if nr > 1 else []
    vmem_bytes = (2 * TB * TR + 2 * TR + 2 * TB) * itemsize + (4 << 20)
    if nr > 1:
        vmem_bytes += TB * 128 * 4
    vmem_limit = min(max(vmem_bytes, 32 << 20), (device_cap * 7) // 8)

    cost = pl.CostEstimate(
        flops=2 * B * R,
        transcendentals=0,
        bytes_accessed=(B * R + nb * R + B) * itemsize,
    )

    out = pl.pallas_call(
        _make_kernel(R, TR, nr),
        out_shape=jax.ShapeDtypeStruct((1, B), x.dtype),
        grid_spec=pltpu.PrefetchScalarGridSpec(
            num_scalar_prefetch=0,
            grid=(nb, nr),
            in_specs=[
                pl.BlockSpec((TB, TR), lambda i, k: (i, k)),        # x: streamed
                pl.BlockSpec((1, TR), lambda i, k: (0, k)),         # weight
                pl.BlockSpec(memory_space=pltpu.MemorySpace.SMEM),  # bias scalar
            ],
            out_specs=pl.BlockSpec((1, TB), lambda i, k: (0, i)),   # lane-dense slab
            scratch_shapes=scratch,
        ),
        compiler_params=pltpu.CompilerParams(
            dimension_semantics=("parallel", "arbitrary"),
            vmem_limit_bytes=int(vmem_limit),
        ),
        cost_estimate=cost,
    )(x, weight, bias)

    return out.reshape(B, 1)


def _reference(x, weight, bias):
    return jnp.maximum(x, 0.0) @ weight.T + bias[None, :]


if __name__ == "__main__":
    # Small shapes consistent with the module: Predictor(rep_size=32), batch=8.
    rep_size = 32
    batch = 8

    key = jax.random.PRNGKey(0)
    kx, kw, kb = jax.random.split(key, 3)

    # PyTorch nn.Linear-style init: weight (out=1, in=rep_size), bias (1,).
    bound = 1.0 / (rep_size ** 0.5)
    weight = jax.random.uniform(kw, (1, rep_size), jnp.float32, -bound, bound)
    bias = jax.random.uniform(kb, (1,), jnp.float32, -bound, bound)
    x = jax.random.normal(kx, (batch, rep_size), jnp.float32)

    out = jax.block_until_ready(predictor_forward(x, weight, bias))
    ref = _reference(x, weight, bias)
    assert out.shape == (batch, 1), out.shape
    assert jnp.allclose(out, ref, atol=1e-5, rtol=1e-5), (out, ref)

    # Second check: force the multi-block paths (ragged last batch block, no
    # padding; R-tiling with the VMEM accumulator and masked ragged R block)
    # by shrinking the tile-picking budget, while keeping shapes small.
    kx2, kw2, kb2 = jax.random.split(jax.random.PRNGKey(1), 3)
    B2, R2 = 300, 1024
    x2 = jax.random.normal(kx2, (B2, R2), jnp.float32)
    w2 = jax.random.uniform(kw2, (1, R2), jnp.float32, -0.1, 0.1)
    b2 = jax.random.uniform(kb2, (1,), jnp.float32, -0.1, 0.1)
    out2 = jax.block_until_ready(
        predictor_forward(x2, w2, b2, tile_vmem_budget=1 << 20))
    ref2 = _reference(x2, w2, b2)
    assert out2.shape == (B2, 1), out2.shape
    assert jnp.allclose(out2, ref2, atol=1e-4, rtol=1e-4)

    print("KERNEL_OK")
</pallas_src>

<mosaic_0001>
module attributes {stable_mosaic.version = 11 : i64} {
  func.func @kernel(%arg0: i32, %arg1: i32, %arg2: memref<8x32xf32, #tpu.memory_space<vmem>>, %arg3: memref<1x32xf32, #tpu.memory_space<vmem>>, %arg4: memref<1xf32, #tpu.memory_space<smem>>, %arg5: memref<1x8xf32, #tpu.memory_space<vmem>>) attributes {dimension_semantics = [#tpu.dimension_semantics<parallel>, #tpu.dimension_semantics<arbitrary>], iteration_bounds = array<i64: 1, 1>, scalar_prefetch = 0 : i64, scratch_operands = 0 : i64, tpu.core_type = #tpu.core_type<tc>, window_params = [{transform_indices = @transform_0, window_bounds = array<i64: 8, 32>}, {transform_indices = @transform_1, window_bounds = array<i64: 1, 32>}, {transform_indices = @transform_2, window_bounds = array<i64: 1>}, {transform_indices = @transform_3, window_bounds = array<i64: 1, 8>}]} {
    %c0 = arith.constant 0 : index
    %c0_0 = arith.constant 0 : index
    %0 = vector.load %arg2[%c0, %c0_0] : memref<8x32xf32, #tpu.memory_space<vmem>>, vector<8x32xf32>
    %cst = arith.constant 0.000000e+00 : f32
    %1 = vector.broadcast %cst : f32 to vector<8x32xf32>
    %2 = arith.maximumf %0, %1 : vector<8x32xf32>
    %c0_1 = arith.constant 0 : index
    %c0_2 = arith.constant 0 : index
    %3 = vector.load %arg3[%c0_1, %c0_2] : memref<1x32xf32, #tpu.memory_space<vmem>>, vector<1x32xf32>
    %4 = vector.broadcast %3 : vector<1x32xf32> to vector<8x32xf32>
    %5 = arith.mulf %2, %4 : vector<8x32xf32>
    %cst_3 = arith.constant dense<0.000000e+00> : vector<8xf32>
    %6 = vector.multi_reduction <add>, %5, %cst_3 [1] : vector<8x32xf32> to vector<8xf32>
    %c0_4 = arith.constant 0 : index
    %7 = memref.load %arg4[%c0_4] : memref<1xf32, #tpu.memory_space<smem>>
    %8 = vector.broadcast %7 : f32 to vector<8xf32>
    %9 = arith.addf %6, %8 : vector<8xf32>
    %10 = vector.shape_cast %9 : vector<8xf32> to vector<1x8xf32>
    %c0_5 = arith.constant 0 : index
    %c0_6 = arith.constant 0 : index
    %11 = vector.load %arg5[%c0_5, %c0_6] : memref<1x8xf32, #tpu.memory_space<vmem>>, vector<1x8xf32>
    tpu.vector_store %arg5[%c0_5, %c0_6], %10 {strides = array<i32>} : memref<1x8xf32, #tpu.memory_space<vmem>>, vector<1x8xf32>,
    return
  }
  func.func @transform_0(%arg0: i32, %arg1: i32) -> (i32, i32) {
    %c0_i32 = arith.constant 0 : i32
    return %arg0, %arg1 : i32, i32
  }
  func.func @transform_1(%arg0: i32, %arg1: i32) -> (i32, i32) {
    %c0_i32 = arith.constant 0 : i32
    %c0_i32_0 = arith.constant 0 : i32
    return %c0_i32, %arg1 : i32, i32
  }
  func.func @transform_2(%arg0: i32, %arg1: i32) -> i32 {
    %c0_i32 = arith.constant 0 : i32
    %c0_i32_0 = arith.constant 0 : i32
    return %c0_i32 : i32
  }
  func.func @transform_3(%arg0: i32, %arg1: i32) -> (i32, i32) {
    %c0_i32 = arith.constant 0 : i32
    %c0_i32_0 = arith.constant 0 : i32
    return %c0_i32, %arg0 : i32, i32
  }
}

</mosaic_0001>

<llo_original>
// kernel: tpu_custom_call.1
$region0: #{tpu_custom_call.1}
  #allocation0 [shape = 'u32[]', space=smem, size = 0x4, offset = 0x4, fixed_abs, tag = 'smem constant byte address 0x4 - core index']
  #allocation1 [shape = 'u32[72,128]{1,0:T(1,128)}', space=vmem, size = 0x9000, scoped, tag = 'internal scratch']
  #allocation2 [shape = 'f32[1]{0:T(128)S(6)}', space=smem, size = 0x200, scoped, tag = 'scoped memory for tpu_custom_call.1']
  %s0 = inlined_call_operand.hbm [shape: f32[8,32], index: 0, kind: input, shape index: {}]
  %s1 = inlined_call_operand.vmem [shape: f32[1,32], index: 1, kind: input, shape index: {}]
  %s2 = inlined_call_operand.<no memory space> [shape: f32[1], index: 2, kind: input, shape index: {}]
  %s3 = inlined_call_operand.hbm [shape: f32[1,8], index: 3, kind: output, shape index: {}]
  %s4 = sld [smem:[#allocation0]]
  $region26: #{tpu_custom_call.1} parent=0
    _
  %s6 = ssub.s32 1, %s4
  %s7 = scalar_select 0, %s6, %s4
  %8 = sst [smem:[#allocation2]] %s2
  $region1: #{tpu_custom_call.1} parent=0
    #allocation3 [shape = 'u8[4096]{0}', space=vmem, size = 0x1000, scoped, tag = 'input window, operand 0, single buffered']
    #allocation4 [shape = 's32[1]{0}', space=sflag, size = 0x4, scoped, tag = 'scoped memory for tpu_custom_call.1']
    #allocation5 [shape = 's32[1]{0}', space=sflag, size = 0x4, scoped, tag = 'scoped memory for tpu_custom_call.1']
    #allocation6 [shape = 'u8[512]{0}', space=vmem, size = 0x400, scoped, tag = 'output window, operand 0, single buffered']
    %9 = vsyncpa [#allocation4], 0
    %10 = vsyncpa [#allocation5], 0
    // Predicated region
    $region2: #{tpu_custom_call.1} parent=1 // pred_check
      _
    $region3: #{tpu_custom_call.1} parent=1 // pred_check_branch
      %12 = sbr.rel (0) target = $region5
    $region4: #{tpu_custom_call.1} parent=1 // pred_region
      %14 = vsyncadd [#allocation4], 0
      %s16 = sshll.u32 %s0, 4
      %s17 = int_to_ptr.hbm [resolvable:$true] %s16
      %s18 = sshll.u32 [#allocation3], 4
      %s19 = int_to_ptr.vmem [resolvable:$true] %s18
      %21 = dma.hbm_to_vmem [thread:$0]  %s17, 128, %s19, [#allocation4]
    $region5: #{tpu_custom_call.1} parent=1 // pred_fallthru
      _
    // Predicated region
    $region6: #{tpu_custom_call.1} parent=1 // pred_check
      _
    $region7: #{tpu_custom_call.1} parent=1 // pred_check_branch
      %23 = sbr.rel (0) target = $region9
    $region8: #{tpu_custom_call.1} parent=1 // pred_region
      _
    $region9: #{tpu_custom_call.1} parent=1 // pred_fallthru
      _
    // Predicated region
    $region10: #{tpu_custom_call.1} parent=1 // pred_check
      _
    $region11: #{tpu_custom_call.1} parent=1 // pred_check_branch
      %25 = sbr.rel (0) target = $region13
    $region12: #{tpu_custom_call.1} parent=1 // pred_region
      _
    $region13: #{tpu_custom_call.1} parent=1 // pred_fallthru
      _
    // Predicated region
    $region14: #{tpu_custom_call.1} parent=1 // pred_check
      _
    $region15: #{tpu_custom_call.1} parent=1 // pred_check_branch
      %27 = sbr.rel (0) target = $region17
    $region16: #{tpu_custom_call.1} parent=1 // pred_region
      %29 = dma.done [#allocation4], 128
    $region17: #{tpu_custom_call.1} parent=1 // pred_fallthru
      _
    %v30 = vld [vmem:[#allocation3] sm:$0xff]
    %v31 = vmax.f32 %v30, 0.0
    %v32 = vld [vmem:[%s1] sm:$0x1]
    %v34 = vperm.slane %v32, 0
    %v36 = vmul.f32 %v31, %v34
    %vm37 = vcmask 261120
    %v38 = vsel %vm37, %v36, 0.0
    %39 = vadd.xlane.f32.xlu0 %v38
    %v40 = vpop.xlane.xlu0 %39
    %s41 = sld [smem:[#allocation2]]
    %v42 = vstv %s41
    %v43 = vadd.f32 %v40, %v42
    %v45 = vlaneseq
    %v46 = vand.u32 %v45, 127
    %v47 = vperm.slane %v43, %v46
    %vm49 = vcmask 57344
    %50 = vst.msk [vmem:[#allocation6] sm:$0x1] %vm49, %v47
    // Predicated region
    $region18: #{tpu_custom_call.1} parent=1 // pred_check
      _
    $region19: #{tpu_custom_call.1} parent=1 // pred_check_branch
      %52 = sbr.rel (0) target = $region21
    $region20: #{tpu_custom_call.1} parent=1 // pred_region
      %54 = vsyncadd [#allocation5], 0
      %s56 = sshll.u32 [#allocation6], 4
      %s57 = int_to_ptr.vmem [resolvable:$true] %s56
      %s58 = sshll.u32 %s3, 4
      %s59 = int_to_ptr.hbm [resolvable:$true] %s58
      %61 = dma.vmem_to_hbm [thread:$0]  %s57, 16, %s59, [#allocation5]
    $region21: #{tpu_custom_call.1} parent=1 // pred_fallthru
      _
    // Predicated region
    $region22: #{tpu_custom_call.1} parent=1 // pred_check
      _
    $region23: #{tpu_custom_call.1} parent=1 // pred_check_branch
      %63 = sbr.rel (0) target = $region25
    $region24: #{tpu_custom_call.1} parent=1 // pred_region
      %65 = dma.done [#allocation5], 16
    $region25: #{tpu_custom_call.1} parent=1 // pred_fallthru
      _
    %66 = vsyncpa [#allocation4], 1
    %67 = vsyncpa [#allocation5], 1

</llo_original>
